<compile_context>
chip_gen: v5e
topology: v5e:2x2
jax: 0.10.0
libtpu: 0.0.40
codegen_flags: <defaults>
</compile_context>

<pallas_src>
import functools

import jax
import jax.numpy as jnp
import numpy as np
from jax.experimental import pallas as pl
from jax.experimental.pallas import tpu as pltpu

_LANES = 128


def _round_up(x, m):
    return (x + m - 1) // m * m


def _sigmoid(v):
    # tanh form: single EUP op, no divide; equals 1/(1+exp(-v)) to f32 rounding.
    return 0.5 * jnp.tanh(0.5 * v) + 0.5


def _num_tensorcores():
    # v5e/v6e: 1 TensorCore per chip; v7x: 2.  Fall back to 1 (always correct,
    # merely leaves the second v7x core idle if detection fails).
    try:
        info = pltpu.get_tpu_info()
    except Exception:
        return 1
    for attr in ("num_tensorcores", "tensorcores_per_chip", "num_cores_per_chip"):
        v = getattr(info, attr, None)
        if isinstance(v, int) and v > 0:
            return max(1, min(2, v))
    return 1


def _vmem_budget_bytes():
    # Generation-aware scoped-VMEM request.  Conservative default assumes the
    # smallest physical VMEM (v7x per-TC: 64 MiB) when the query is unavailable.
    phys = 64 * 2**20
    try:
        info = pltpu.get_tpu_info()
        phys = int(getattr(info, "vmem_capacity_bytes", phys))
    except Exception:
        pass
    return min(48 * 2**20, (3 * phys) // 4)


def _focal_eiou_kernel(preds_ref, tgt_ref, out_ref, *, bce_coeff, gamma,
                       n_valid, tile_rows):
    shard = pl.program_id(0)
    inner = pl.program_id(1)
    tiles_per_shard = pl.num_programs(1)

    @pl.when(inner == 0)
    def _():
        out_ref[...] = jnp.zeros_like(out_ref)

    # ---------------- BCE with logits (frees the objectness planes early) ----
    x_obj = preds_ref[0]
    y_obj = tgt_ref[0]
    # log(1 + exp(-|x|)) is well conditioned since -|x| <= 0.
    bce = (jnp.maximum(x_obj, 0.0) - x_obj * y_obj
           + jnp.log(1.0 + jnp.exp(-jnp.abs(x_obj))))
    contrib = bce_coeff * bce

    # ---------------- Focal Efficient IoU, per element ------------------------
    p0 = _sigmoid(preds_ref[1])
    p1 = _sigmoid(preds_ref[2])
    p2 = _sigmoid(preds_ref[3])
    p3 = _sigmoid(preds_ref[4])
    t0 = tgt_ref[1]
    t1 = tgt_ref[2]
    t2 = tgt_ref[3]
    t3 = tgt_ref[4]

    x_p1 = jnp.minimum(p2, p0)
    x_p2 = jnp.maximum(p2, p0)
    y_p1 = jnp.minimum(p1, p3)
    y_p2 = jnp.maximum(p1, p3)

    # Reuse widths/heights for the areas (drops the abs/redundant subtracts).
    w = x_p2 - x_p1
    h = y_p2 - y_p1
    w_t = t2 - t0
    h_t = t3 - t1
    pred_area = w * h
    target_area = w_t * h_t

    x1 = jnp.maximum(x_p1, t0)
    x2 = jnp.minimum(x_p2, t2)
    y1 = jnp.maximum(y_p1, t1)
    y2 = jnp.minimum(y_p2, t3)
    overlap = (x2 - x1) * (y2 - y1)

    ov_cl = jnp.maximum(overlap, 0.0)
    iou_e = ov_cl / (target_area + pred_area - ov_cl)    # EfficientIoUExample
    # IoUOneExample: 0 when raw overlap < 0, otherwise the identical quotient
    # (saves a second divide per element).
    iou1 = jnp.where(overlap < 0.0, 0.0, iou_e)

    # Enclosing box (computed right before the penalty terms to limit liveness).
    x1_c = jnp.minimum(x_p1, t0)
    x2_c = jnp.maximum(x_p2, t2)
    y1_c = jnp.minimum(y_p1, t1)
    y2_c = jnp.maximum(y_p2, t3)
    c_w = x2_c - x1_c
    c_h = y2_c - y1_c

    # Penalty terms combined over one common denominator: one divide instead of
    # three (center/diag + dw^2/c_w^2 + dh^2/h_t^2), exact f32 divides kept.
    dcx2 = (x_p2 + x_p1) - (t2 + t0)    # 2 * (center_pred_x - center_target_x)
    dcy2 = (y_p2 + y_p1) - (t3 + t1)
    dw = w - w_t
    dh = h - h_t
    cw2 = c_w * c_w
    ht2 = h_t * h_t                      # target height^2 -- matches PyTorch ref
    diag = cw2 + c_h * c_h
    penalty_num = (0.25 * (dcx2 * dcx2 + dcy2 * dcy2) * (cw2 * ht2)
                   + (dw * dw) * (diag * ht2)
                   + (dh * dh) * (diag * cw2))
    penalty = penalty_num / (diag * cw2 * ht2)

    eiou_loss = 1.0 - (iou_e - penalty)

    if gamma == 0.5:          # specialize focal power (generic pow = 2 EUP ops)
        iou_pow = jnp.sqrt(iou1)
    elif gamma == 1.0:
        iou_pow = iou1
    elif gamma == 2.0:
        iou_pow = iou1 * iou1
    else:
        iou_pow = iou1 ** gamma

    # loss = mean(bce_coeff * bce_i + focal_i) over the N real examples.
    contrib = contrib + iou_pow * eiou_loss

    block_row0 = (shard * tiles_per_shard + inner) * tile_rows

    def _accumulate(c):
        # Fold sublane groups into one (8,128) vreg (pure VPU adds) and add into
        # the resident output block; HBM writeback happens once per shard.
        out_ref[...] += jnp.sum(c.reshape(tile_rows // 8, 8, _LANES), axis=0)

    # Only tiles that can contain padded elements pay for the mask (padded
    # elements produce NaN/Inf and must be dropped via a select, not a mul).
    is_tail = (block_row0 + tile_rows) * _LANES > n_valid

    @pl.when(jnp.logical_not(is_tail))
    def _():
        _accumulate(contrib)

    @pl.when(is_tail)
    def _():
        row_ids = jax.lax.broadcasted_iota(jnp.int32, (tile_rows, _LANES), 0)
        lane_ids = jax.lax.broadcasted_iota(jnp.int32, (tile_rows, _LANES), 1)
        gidx = (block_row0 + row_ids) * _LANES + lane_ids
        _accumulate(jnp.where(gidx < n_valid, contrib, 0.0))


def focal_efficient_iou(preds, target, bce_coeff=0.2, gamma=0.5, *,
                        tile_rows=2048, num_shards=None):
    """preds, target: (N, 5) float32 — same layout as the PyTorch module."""
    preds = jnp.asarray(preds, jnp.float32)
    target = jnp.asarray(target, jnp.float32)
    assert preds.shape == target.shape and preds.ndim == 2 and preds.shape[1] == 5
    n = preds.shape[0]

    if num_shards is None:
        num_shards = _num_tensorcores()
    num_shards = max(1, int(num_shards))

    vmem_cap = _vmem_budget_bytes()
    # 2 inputs x 2 pipeline buffers of (5, tile_rows, 128) f32 + headroom must fit.
    per_row_bytes = 4 * 5 * _LANES * 4
    tile_rows_cap = max(8, ((vmem_cap - 8 * 2**20) // per_row_bytes) // 8 * 8)

    r0 = -(-n // _LANES)                                   # 128-lane rows needed
    tile_rows = max(8, min(_round_up(int(tile_rows), 8), tile_rows_cap,
                           _round_up(r0, 8)))

    tiles_per_shard = max(1, -(-r0 // (num_shards * tile_rows)))
    if r0 >= num_shards * 32:
        # Keep >= 2 inner steps per shard so each core still double-buffers DMA.
        tiles_per_shard = max(tiles_per_shard, 2)
    # Re-derive tile_rows from the tile count so padding waste stays minimal
    # (instead of rounding N up to a full tile_rows*num_shards multiple).
    tile_rows = _round_up(max(1, -(-r0 // (num_shards * tiles_per_shard))), 8)
    r = tile_rows * num_shards * tiles_per_shard
    n_pad = r * _LANES

    def to_coord_major(a):
        # TODO(synk): producers should emit this (5, r, 128) coordinate-major
        # layout directly (or keep it resident across repeated loss calls) so a
        # bandwidth-bound kernel doesn't pay an extra HBM relayout pass.
        a = jnp.pad(a, ((0, n_pad - n), (0, 0)))
        return a.T.reshape(5, r, _LANES)

    preds_cm = to_coord_major(preds)
    tgt_cm = to_coord_major(target)

    kernel = functools.partial(
        _focal_eiou_kernel, bce_coeff=float(bce_coeff), gamma=float(gamma),
        n_valid=int(n), tile_rows=int(tile_rows))

    tile_bytes = 5 * tile_rows * _LANES * 4
    # 2 inputs x 2 pipeline buffers + small output block + headroom; the cap is
    # generation-aware so a v7x TC (64 MiB physical) is never over-subscribed.
    vmem_limit = int(min(vmem_cap, 4 * tile_bytes + 8 * 2**20))

    tps = int(tiles_per_shard)
    partials = pl.pallas_call(
        kernel,
        out_shape=jax.ShapeDtypeStruct((num_shards * 8, _LANES), jnp.float32),
        grid=(num_shards, tiles_per_shard),
        in_specs=[
            pl.BlockSpec((5, tile_rows, _LANES),
                         lambda s, i: (0, s * tps + i, 0)),
            pl.BlockSpec((5, tile_rows, _LANES),
                         lambda s, i: (0, s * tps + i, 0)),
        ],
        out_specs=pl.BlockSpec((8, _LANES), lambda s, i: (s, 0)),
        compiler_params=pltpu.CompilerParams(
            dimension_semantics=("parallel", "arbitrary"),
            vmem_limit_bytes=vmem_limit,
            allow_input_fusion=[True, True]),
    )(preds_cm, tgt_cm)

    # Final tiny reduction + mean in the wrapper (num_shards*8 x 128 f32).
    return jnp.sum(partials) / jnp.float32(n)


def _reference_numpy(preds, target, bce_coeff=0.2, gamma=0.5):
    preds = np.asarray(preds, np.float64)
    target = np.asarray(target, np.float64)
    n = preds.shape[0]
    loss_sum = 0.0
    for i in range(n):
        p = 1.0 / (1.0 + np.exp(-preds[i, 1:]))
        t = target[i, 1:]
        pa = abs(p[2] - p[0]) * abs(p[3] - p[1])
        ta = (t[2] - t[0]) * (t[3] - t[1])
        x_p1, x_p2 = min(p[2], p[0]), max(p[2], p[0])
        y_p1, y_p2 = min(p[1], p[3]), max(p[1], p[3])
        x1, x2 = max(x_p1, t[0]), min(x_p2, t[2])
        y1, y2 = max(y_p1, t[1]), min(y_p2, t[3])
        ov = (x2 - x1) * (y2 - y1)
        iou = 0.0 if ov < 0 else ov / (ta + pa - ov)
        ov_c = 0.0 if ov < 0 else ov
        iou_e = ov_c / (ta + pa - ov_c)
        x1c, x2c = min(x_p1, t[0]), max(x_p2, t[2])
        y1c, y2c = min(y_p1, t[1]), max(y_p2, t[3])
        c_w = x2c - x1c; w = x_p2 - x_p1; w_t = t[2] - t[0]
        c_h = y2c - y1c; h = y_p2 - y_p1; h_t = t[3] - t[1]
        cpx = (x_p2 + x_p1) / 2.0; cpy = (y_p2 + y_p1) / 2.0
        ctx = (t[2] + t[0]) / 2.0; cty = (t[3] + t[1]) / 2.0
        diag = c_w ** 2 + c_h ** 2
        center = ((cpx - ctx) ** 2 + (cpy - cty) ** 2) / diag
        wp = (w - w_t) ** 2 / c_w ** 2
        hp = (h - h_t) ** 2 / h_t ** 2
        eiou = iou_e - (center + wp + hp)
        loss_sum += iou ** gamma * (1.0 - eiou)
    x = preds[:, 0]; y = target[:, 0]
    bce = np.mean(np.maximum(x, 0.0) - x * y + np.log1p(np.exp(-np.abs(x))))
    return bce_coeff * bce + loss_sum / n


def _make_inputs(key, n):
    k1, k2, k3, k4 = jax.random.split(key, 4)
    preds = jax.random.normal(k1, (n, 5), jnp.float32)
    obj = jax.random.bernoulli(k2, 0.5, (n,)).astype(jnp.float32)
    xy1 = jax.random.uniform(k3, (n, 2), jnp.float32, 0.05, 0.4)
    wh = jax.random.uniform(k4, (n, 2), jnp.float32, 0.1, 0.5)
    target = jnp.concatenate([obj[:, None], xy1, xy1 + wh], axis=1)
    return preds, target


if __name__ == "__main__":
    key = jax.random.PRNGKey(0)
    k_small, k_large = jax.random.split(key, 2)

    # Small shape consistent with the module's (N, 5) inputs.
    N = 8
    preds, target = _make_inputs(k_small, N)
    out = focal_efficient_iou(preds, target, bce_coeff=0.2, gamma=0.5)
    out = jax.block_until_ready(out)
    ref = _reference_numpy(np.array(preds), np.array(target), 0.2, 0.5)
    np.testing.assert_allclose(np.float64(out), ref, rtol=1e-4, atol=1e-5)

    # Larger check: exercises multi-tile accumulation, the (possibly >1) shard
    # axis, the unmasked fast path and the masked tail tile (N % 128 != 0).
    N2 = 5000
    preds2, target2 = _make_inputs(k_large, N2)
    out2 = focal_efficient_iou(preds2, target2, bce_coeff=0.2, gamma=0.5,
                               tile_rows=16)
    out2 = jax.block_until_ready(out2)
    ref2 = _reference_numpy(np.array(preds2), np.array(target2), 0.2, 0.5)
    np.testing.assert_allclose(np.float64(out2), ref2, rtol=1e-4, atol=1e-5)

    print("KERNEL_OK")
</pallas_src>

<mosaic_0001>
module attributes {stable_mosaic.version = 11 : i64} {
  func.func @_focal_eiou_kernel(%arg0: i32, %arg1: i32, %arg2: memref<5x8x128xf32, #tpu.memory_space<vmem>>, %arg3: memref<5x8x128xf32, #tpu.memory_space<vmem>>, %arg4: memref<8x128xf32, #tpu.memory_space<vmem>>) attributes {dimension_semantics = [#tpu.dimension_semantics<parallel>, #tpu.dimension_semantics<arbitrary>], iteration_bounds = array<i64: 1, 1>, scalar_prefetch = 0 : i64, scratch_operands = 0 : i64, tpu.core_type = #tpu.core_type<tc>, window_params = [{transform_indices = @transform_0, window_bounds = array<i64: 5, 8, 128>}, {transform_indices = @transform_1, window_bounds = array<i64: 5, 8, 128>}, {transform_indices = @transform_2, window_bounds = array<i64: 8, 128>}]} {
    %c0_i32 = arith.constant 0 : i32
    %0 = arith.cmpi eq, %arg1, %c0_i32 : i32
    %1 = arith.extui %0 : i1 to i32
    %c0_i32_0 = arith.constant 0 : i32
    %2 = arith.cmpi ne, %1, %c0_i32_0 : i32
    scf.if %2 {
      %cst_50 = arith.constant 0.000000e+00 : f32
      %144 = vector.broadcast %cst_50 : f32 to vector<8x128xf32>
      %c0_51 = arith.constant 0 : index
      %c0_52 = arith.constant 0 : index
      %145 = vector.load %arg4[%c0_51, %c0_52] : memref<8x128xf32, #tpu.memory_space<vmem>>, vector<8x128xf32>
      tpu.vector_store %arg4[%c0_51, %c0_52], %144 {strides = array<i32>} : memref<8x128xf32, #tpu.memory_space<vmem>>, vector<8x128xf32>,
    } else {
    }
    %c0 = arith.constant 0 : index
    %c0_1 = arith.constant 0 : index
    %c0_2 = arith.constant 0 : index
    %3 = vector.load %arg2[%c0, %c0_1, %c0_2] : memref<5x8x128xf32, #tpu.memory_space<vmem>>, vector<1x8x128xf32>
    %4 = vector.shape_cast %3 : vector<1x8x128xf32> to vector<8x128xf32>
    %c0_3 = arith.constant 0 : index
    %c0_4 = arith.constant 0 : index
    %c0_5 = arith.constant 0 : index
    %5 = vector.load %arg3[%c0_3, %c0_4, %c0_5] : memref<5x8x128xf32, #tpu.memory_space<vmem>>, vector<1x8x128xf32>
    %6 = vector.shape_cast %5 : vector<1x8x128xf32> to vector<8x128xf32>
    %cst = arith.constant 0.000000e+00 : f32
    %7 = vector.broadcast %cst : f32 to vector<8x128xf32>
    %8 = arith.maximumf %4, %7 : vector<8x128xf32>
    %9 = arith.mulf %4, %6 : vector<8x128xf32>
    %10 = arith.subf %8, %9 : vector<8x128xf32>
    %11 = math.absf %4 : vector<8x128xf32>
    %cst_6 = arith.constant 0.000000e+00 : f32
    %12 = vector.broadcast %cst_6 : f32 to vector<8x128xf32>
    %13 = arith.subf %12, %11 : vector<8x128xf32>
    %14 = math.exp %13 : vector<8x128xf32>
    %cst_7 = arith.constant 1.000000e+00 : f32
    %15 = vector.broadcast %cst_7 : f32 to vector<8x128xf32>
    %16 = arith.addf %15, %14 : vector<8x128xf32>
    %17 = math.log %16 : vector<8x128xf32>
    %18 = arith.addf %10, %17 : vector<8x128xf32>
    %cst_8 = arith.constant 2.000000e-01 : f32
    %19 = vector.broadcast %cst_8 : f32 to vector<8x128xf32>
    %20 = arith.mulf %19, %18 : vector<8x128xf32>
    %c1 = arith.constant 1 : index
    %c0_9 = arith.constant 0 : index
    %c0_10 = arith.constant 0 : index
    %21 = vector.load %arg2[%c1, %c0_9, %c0_10] : memref<5x8x128xf32, #tpu.memory_space<vmem>>, vector<1x8x128xf32>
    %22 = vector.shape_cast %21 : vector<1x8x128xf32> to vector<8x128xf32>
    %cst_11 = arith.constant 5.000000e-01 : f32
    %23 = vector.broadcast %cst_11 : f32 to vector<8x128xf32>
    %24 = arith.mulf %23, %22 : vector<8x128xf32>
    %25 = math.tanh %24 : vector<8x128xf32>
    %cst_12 = arith.constant 5.000000e-01 : f32
    %26 = vector.broadcast %cst_12 : f32 to vector<8x128xf32>
    %27 = arith.mulf %26, %25 : vector<8x128xf32>
    %cst_13 = arith.constant 5.000000e-01 : f32
    %28 = vector.broadcast %cst_13 : f32 to vector<8x128xf32>
    %29 = arith.addf %27, %28 : vector<8x128xf32>
    %c2 = arith.constant 2 : index
    %c0_14 = arith.constant 0 : index
    %c0_15 = arith.constant 0 : index
    %30 = vector.load %arg2[%c2, %c0_14, %c0_15] : memref<5x8x128xf32, #tpu.memory_space<vmem>>, vector<1x8x128xf32>
    %31 = vector.shape_cast %30 : vector<1x8x128xf32> to vector<8x128xf32>
    %cst_16 = arith.constant 5.000000e-01 : f32
    %32 = vector.broadcast %cst_16 : f32 to vector<8x128xf32>
    %33 = arith.mulf %32, %31 : vector<8x128xf32>
    %34 = math.tanh %33 : vector<8x128xf32>
    %cst_17 = arith.constant 5.000000e-01 : f32
    %35 = vector.broadcast %cst_17 : f32 to vector<8x128xf32>
    %36 = arith.mulf %35, %34 : vector<8x128xf32>
    %cst_18 = arith.constant 5.000000e-01 : f32
    %37 = vector.broadcast %cst_18 : f32 to vector<8x128xf32>
    %38 = arith.addf %36, %37 : vector<8x128xf32>
    %c3 = arith.constant 3 : index
    %c0_19 = arith.constant 0 : index
    %c0_20 = arith.constant 0 : index
    %39 = vector.load %arg2[%c3, %c0_19, %c0_20] : memref<5x8x128xf32, #tpu.memory_space<vmem>>, vector<1x8x128xf32>
    %40 = vector.shape_cast %39 : vector<1x8x128xf32> to vector<8x128xf32>
    %cst_21 = arith.constant 5.000000e-01 : f32
    %41 = vector.broadcast %cst_21 : f32 to vector<8x128xf32>
    %42 = arith.mulf %41, %40 : vector<8x128xf32>
    %43 = math.tanh %42 : vector<8x128xf32>
    %cst_22 = arith.constant 5.000000e-01 : f32
    %44 = vector.broadcast %cst_22 : f32 to vector<8x128xf32>
    %45 = arith.mulf %44, %43 : vector<8x128xf32>
    %cst_23 = arith.constant 5.000000e-01 : f32
    %46 = vector.broadcast %cst_23 : f32 to vector<8x128xf32>
    %47 = arith.addf %45, %46 : vector<8x128xf32>
    %c4 = arith.constant 4 : index
    %c0_24 = arith.constant 0 : index
    %c0_25 = arith.constant 0 : index
    %48 = vector.load %arg2[%c4, %c0_24, %c0_25] : memref<5x8x128xf32, #tpu.memory_space<vmem>>, vector<1x8x128xf32>
    %49 = vector.shape_cast %48 : vector<1x8x128xf32> to vector<8x128xf32>
    %cst_26 = arith.constant 5.000000e-01 : f32
    %50 = vector.broadcast %cst_26 : f32 to vector<8x128xf32>
    %51 = arith.mulf %50, %49 : vector<8x128xf32>
    %52 = math.tanh %51 : vector<8x128xf32>
    %cst_27 = arith.constant 5.000000e-01 : f32
    %53 = vector.broadcast %cst_27 : f32 to vector<8x128xf32>
    %54 = arith.mulf %53, %52 : vector<8x128xf32>
    %cst_28 = arith.constant 5.000000e-01 : f32
    %55 = vector.broadcast %cst_28 : f32 to vector<8x128xf32>
    %56 = arith.addf %54, %55 : vector<8x128xf32>
    %c1_29 = arith.constant 1 : index
    %c0_30 = arith.constant 0 : index
    %c0_31 = arith.constant 0 : index
    %57 = vector.load %arg3[%c1_29, %c0_30, %c0_31] : memref<5x8x128xf32, #tpu.memory_space<vmem>>, vector<1x8x128xf32>
    %58 = vector.shape_cast %57 : vector<1x8x128xf32> to vector<8x128xf32>
    %c2_32 = arith.constant 2 : index
    %c0_33 = arith.constant 0 : index
    %c0_34 = arith.constant 0 : index
    %59 = vector.load %arg3[%c2_32, %c0_33, %c0_34] : memref<5x8x128xf32, #tpu.memory_space<vmem>>, vector<1x8x128xf32>
    %60 = vector.shape_cast %59 : vector<1x8x128xf32> to vector<8x128xf32>
    %c3_35 = arith.constant 3 : index
    %c0_36 = arith.constant 0 : index
    %c0_37 = arith.constant 0 : index
    %61 = vector.load %arg3[%c3_35, %c0_36, %c0_37] : memref<5x8x128xf32, #tpu.memory_space<vmem>>, vector<1x8x128xf32>
    %62 = vector.shape_cast %61 : vector<1x8x128xf32> to vector<8x128xf32>
    %c4_38 = arith.constant 4 : index
    %c0_39 = arith.constant 0 : index
    %c0_40 = arith.constant 0 : index
    %63 = vector.load %arg3[%c4_38, %c0_39, %c0_40] : memref<5x8x128xf32, #tpu.memory_space<vmem>>, vector<1x8x128xf32>
    %64 = vector.shape_cast %63 : vector<1x8x128xf32> to vector<8x128xf32>
    %65 = arith.minimumf %47, %29 : vector<8x128xf32>
    %66 = arith.maximumf %47, %29 : vector<8x128xf32>
    %67 = arith.minimumf %38, %56 : vector<8x128xf32>
    %68 = arith.maximumf %38, %56 : vector<8x128xf32>
    %69 = arith.subf %66, %65 : vector<8x128xf32>
    %70 = arith.subf %68, %67 : vector<8x128xf32>
    %71 = arith.subf %62, %58 : vector<8x128xf32>
    %72 = arith.subf %64, %60 : vector<8x128xf32>
    %73 = arith.mulf %69, %70 : vector<8x128xf32>
    %74 = arith.mulf %71, %72 : vector<8x128xf32>
    %75 = arith.maximumf %65, %58 : vector<8x128xf32>
    %76 = arith.minimumf %66, %62 : vector<8x128xf32>
    %77 = arith.maximumf %67, %60 : vector<8x128xf32>
    %78 = arith.minimumf %68, %64 : vector<8x128xf32>
    %79 = arith.subf %76, %75 : vector<8x128xf32>
    %80 = arith.subf %78, %77 : vector<8x128xf32>
    %81 = arith.mulf %79, %80 : vector<8x128xf32>
    %cst_41 = arith.constant 0.000000e+00 : f32
    %82 = vector.broadcast %cst_41 : f32 to vector<8x128xf32>
    %83 = arith.maximumf %81, %82 : vector<8x128xf32>
    %84 = arith.addf %74, %73 : vector<8x128xf32>
    %85 = arith.subf %84, %83 : vector<8x128xf32>
    %86 = arith.divf %83, %85 : vector<8x128xf32>
    %cst_42 = arith.constant 0.000000e+00 : f32
    %87 = vector.broadcast %cst_42 : f32 to vector<8x128xf32>
    %88 = arith.cmpf olt, %81, %87 : vector<8x128xf32>
    %cst_43 = arith.constant 0.000000e+00 : f32
    %89 = vector.broadcast %cst_43 : f32 to vector<8x128xf32>
    %90 = arith.select %88, %89, %86 : vector<8x128xi1>, vector<8x128xf32>
    %91 = arith.minimumf %65, %58 : vector<8x128xf32>
    %92 = arith.maximumf %66, %62 : vector<8x128xf32>
    %93 = arith.minimumf %67, %60 : vector<8x128xf32>
    %94 = arith.maximumf %68, %64 : vector<8x128xf32>
    %95 = arith.subf %92, %91 : vector<8x128xf32>
    %96 = arith.subf %94, %93 : vector<8x128xf32>
    %97 = arith.addf %66, %65 : vector<8x128xf32>
    %98 = arith.addf %62, %58 : vector<8x128xf32>
    %99 = arith.subf %97, %98 : vector<8x128xf32>
    %100 = arith.addf %68, %67 : vector<8x128xf32>
    %101 = arith.addf %64, %60 : vector<8x128xf32>
    %102 = arith.subf %100, %101 : vector<8x128xf32>
    %103 = arith.subf %69, %71 : vector<8x128xf32>
    %104 = arith.subf %70, %72 : vector<8x128xf32>
    %105 = arith.mulf %95, %95 : vector<8x128xf32>
    %106 = arith.mulf %72, %72 : vector<8x128xf32>
    %107 = arith.mulf %96, %96 : vector<8x128xf32>
    %108 = arith.addf %105, %107 : vector<8x128xf32>
    %109 = arith.mulf %99, %99 : vector<8x128xf32>
    %110 = arith.mulf %102, %102 : vector<8x128xf32>
    %111 = arith.addf %109, %110 : vector<8x128xf32>
    %cst_44 = arith.constant 2.500000e-01 : f32
    %112 = vector.broadcast %cst_44 : f32 to vector<8x128xf32>
    %113 = arith.mulf %112, %111 : vector<8x128xf32>
    %114 = arith.mulf %105, %106 : vector<8x128xf32>
    %115 = arith.mulf %113, %114 : vector<8x128xf32>
    %116 = arith.mulf %103, %103 : vector<8x128xf32>
    %117 = arith.mulf %108, %106 : vector<8x128xf32>
    %118 = arith.mulf %116, %117 : vector<8x128xf32>
    %119 = arith.addf %115, %118 : vector<8x128xf32>
    %120 = arith.mulf %104, %104 : vector<8x128xf32>
    %121 = arith.mulf %108, %105 : vector<8x128xf32>
    %122 = arith.mulf %120, %121 : vector<8x128xf32>
    %123 = arith.addf %119, %122 : vector<8x128xf32>
    %124 = arith.mulf %108, %105 : vector<8x128xf32>
    %125 = arith.mulf %124, %106 : vector<8x128xf32>
    %126 = arith.divf %123, %125 : vector<8x128xf32>
    %127 = arith.subf %86, %126 : vector<8x128xf32>
    %cst_45 = arith.constant 1.000000e+00 : f32
    %128 = vector.broadcast %cst_45 : f32 to vector<8x128xf32>
    %129 = arith.subf %128, %127 : vector<8x128xf32>
    %130 = math.sqrt %90 : vector<8x128xf32>
    %131 = arith.mulf %130, %129 : vector<8x128xf32>
    %132 = arith.addf %20, %131 : vector<8x128xf32>
    %c1_i32 = arith.constant 1 : i32
    %133 = arith.muli %arg0, %c1_i32 : i32
    %134 = arith.addi %133, %arg1 : i32
    %c8_i32 = arith.constant 8 : i32
    %135 = arith.muli %134, %c8_i32 : i32
    %c8_i32_46 = arith.constant 8 : i32
    %136 = arith.addi %135, %c8_i32_46 : i32
    %c128_i32 = arith.constant 128 : i32
    %137 = arith.muli %136, %c128_i32 : i32
    %c8_i32_47 = arith.constant 8 : i32
    %138 = arith.cmpi sgt, %137, %c8_i32_47 : i32
    %true = arith.constant true
    %139 = arith.xori %138, %true : i1
    %140 = arith.extui %139 : i1 to i32
    %c0_i32_48 = arith.constant 0 : i32
    %141 = arith.cmpi ne, %140, %c0_i32_48 : i32
    scf.if %141 {
      %c0_50 = arith.constant 0 : index
      %c0_51 = arith.constant 0 : index
      %144 = vector.load %arg4[%c0_50, %c0_51] : memref<8x128xf32, #tpu.memory_space<vmem>>, vector<8x128xf32>
      %145 = vector.shape_cast %132 : vector<8x128xf32> to vector<1x8x128xf32>
      %cst_52 = arith.constant dense<0.000000e+00> : vector<8x128xf32>
      %146 = vector.multi_reduction <add>, %145, %cst_52 [0] : vector<1x8x128xf32> to vector<8x128xf32>
      %147 = arith.addf %144, %146 : vector<8x128xf32>
      %c0_53 = arith.constant 0 : index
      %c0_54 = arith.constant 0 : index
      %148 = vector.load %arg4[%c0_53, %c0_54] : memref<8x128xf32, #tpu.memory_space<vmem>>, vector<8x128xf32>
      tpu.vector_store %arg4[%c0_53, %c0_54], %147 {strides = array<i32>} : memref<8x128xf32, #tpu.memory_space<vmem>>, vector<8x128xf32>,
    } else {
    }
    %142 = arith.extui %138 : i1 to i32
    %c0_i32_49 = arith.constant 0 : i32
    %143 = arith.cmpi ne, %142, %c0_i32_49 : i32
    scf.if %143 {
      %144 = tpu.iota {dimensions = array<i32: 0>} : vector<8x128xi32>
      %145 = tpu.iota {dimensions = array<i32: 1>} : vector<8x128xi32>
      %146 = vector.broadcast %135 : i32 to vector<8x128xi32>
      %147 = arith.addi %146, %144 : vector<8x128xi32>
      %c128_i32_50 = arith.constant 128 : i32
      %148 = vector.broadcast %c128_i32_50 : i32 to vector<8x128xi32>
      %149 = arith.muli %147, %148 : vector<8x128xi32>
      %150 = arith.addi %149, %145 : vector<8x128xi32>
      %c8_i32_51 = arith.constant 8 : i32
      %151 = vector.broadcast %c8_i32_51 : i32 to vector<8x128xi32>
      %152 = arith.cmpi slt, %150, %151 : vector<8x128xi32>
      %cst_52 = arith.constant 0.000000e+00 : f32
      %153 = vector.broadcast %cst_52 : f32 to vector<8x128xf32>
      %154 = arith.select %152, %132, %153 : vector<8x128xi1>, vector<8x128xf32>
      %c0_53 = arith.constant 0 : index
      %c0_54 = arith.constant 0 : index
      %155 = vector.load %arg4[%c0_53, %c0_54] : memref<8x128xf32, #tpu.memory_space<vmem>>, vector<8x128xf32>
      %156 = vector.shape_cast %154 : vector<8x128xf32> to vector<1x8x128xf32>
      %cst_55 = arith.constant dense<0.000000e+00> : vector<8x128xf32>
      %157 = vector.multi_reduction <add>, %156, %cst_55 [0] : vector<1x8x128xf32> to vector<8x128xf32>
      %158 = arith.addf %155, %157 : vector<8x128xf32>
      %c0_56 = arith.constant 0 : index
      %c0_57 = arith.constant 0 : index
      %159 = vector.load %arg4[%c0_56, %c0_57] : memref<8x128xf32, #tpu.memory_space<vmem>>, vector<8x128xf32>
      tpu.vector_store %arg4[%c0_56, %c0_57], %158 {strides = array<i32>} : memref<8x128xf32, #tpu.memory_space<vmem>>, vector<8x128xf32>,
    } else {
    }
    return
  }
  func.func @transform_0(%arg0: i32, %arg1: i32) -> (i32, i32, i32) {
    %c1_i32 = arith.constant 1 : i32
    %0 = arith.muli %arg0, %c1_i32 : i32
    %1 = arith.addi %0, %arg1 : i32
    %c0_i32 = arith.constant 0 : i32
    %c0_i32_0 = arith.constant 0 : i32
    %c0_i32_1 = arith.constant 0 : i32
    return %c0_i32, %1, %c0_i32_0 : i32, i32, i32
  }
  func.func @transform_1(%arg0: i32, %arg1: i32) -> (i32, i32, i32) {
    %c1_i32 = arith.constant 1 : i32
    %0 = arith.muli %arg0, %c1_i32 : i32
    %1 = arith.addi %0, %arg1 : i32
    %c0_i32 = arith.constant 0 : i32
    %c0_i32_0 = arith.constant 0 : i32
    %c0_i32_1 = arith.constant 0 : i32
    return %c0_i32, %1, %c0_i32_0 : i32, i32, i32
  }
  func.func @transform_2(%arg0: i32, %arg1: i32) -> (i32, i32) {
    %c0_i32 = arith.constant 0 : i32
    %c0_i32_0 = arith.constant 0 : i32
    return %arg0, %c0_i32 : i32, i32
  }
}

</mosaic_0001>

<llo_original>
// kernel: tpu_custom_call.1
$region0: #{tpu_custom_call.1}
  #allocation0 [shape = 'u32[]', space=smem, size = 0x4, offset = 0x4, fixed_abs, tag = 'smem constant byte address 0x4 - core index']
  #allocation1 [shape = 'u32[72,128]{1,0:T(1,128)}', space=vmem, size = 0x9000, scoped, tag = 'internal scratch']
  %s0 = inlined_call_operand.hbm [shape: f32[5,8,128], index: 0, kind: input, shape index: {}]
  %s1 = inlined_call_operand.hbm [shape: f32[5,8,128], index: 1, kind: input, shape index: {}]
  %s2 = inlined_call_operand.hbm [shape: f32[8,128], index: 2, kind: output, shape index: {}]
  %s3 = sld [smem:[#allocation0]]
  $region38: #{tpu_custom_call.1} parent=0
    _
  %s5 = ssub.s32 1, %s3
  %s6 = scalar_select 0, %s5, %s3
  $region1: #{tpu_custom_call.1} parent=0
    #allocation2 [shape = 'u8[20480]{0}', space=vmem, size = 0x5000, scoped, tag = 'input window, operand 0, single buffered']
    #allocation3 [shape = 's32[1]{0}', space=sflag, size = 0x4, scoped, tag = 'scoped memory for tpu_custom_call.1']
    #allocation4 [shape = 's32[1]{0}', space=sflag, size = 0x4, scoped, tag = 'scoped memory for tpu_custom_call.1']
    #allocation5 [shape = 'u8[20480]{0}', space=vmem, size = 0x5000, scoped, tag = 'input window, operand 1, single buffered']
    #allocation6 [shape = 's32[1]{0}', space=sflag, size = 0x4, scoped, tag = 'scoped memory for tpu_custom_call.1']
    #allocation7 [shape = 'u8[4096]{0}', space=vmem, size = 0x1000, scoped, tag = 'output window, operand 0, single buffered']
    %7 = vsyncpa [#allocation3], 0
    %8 = vsyncpa [#allocation6], 0
    %9 = vsyncpa [#allocation4], 0
    // Predicated region
    $region2: #{tpu_custom_call.1} parent=1 // pred_check
      _
    $region3: #{tpu_custom_call.1} parent=1 // pred_check_branch
      %11 = sbr.rel (0) target = $region5
    $region4: #{tpu_custom_call.1} parent=1 // pred_region
      %s12 = sadd.s32 0, 0
      %14 = vsyncadd [#allocation3], 0
      %s15 = smul.addr %s12, 8
      %s16 = scalar_lea.hbm %s0, %s15
      %s17 = sshll.u32 %s16, 4
      %s18 = int_to_ptr.hbm [resolvable:$true] %s17
      %s19 = sshll.u32 [#allocation2], 4
      %s20 = int_to_ptr.vmem [resolvable:$true] %s19
      %25 = dma.hbm_to_vmem [thread:$0]  %s18, 640, %s20, [#allocation3], 128, 128, 8
    $region5: #{tpu_custom_call.1} parent=1 // pred_fallthru
      _
    // Predicated region
    $region6: #{tpu_custom_call.1} parent=1 // pred_check
      _
    $region7: #{tpu_custom_call.1} parent=1 // pred_check_branch
      %27 = sbr.rel (0) target = $region9
    $region8: #{tpu_custom_call.1} parent=1 // pred_region
      %s28 = sadd.s32 0, 0
      %30 = vsyncadd [#allocation6], 0
      %s31 = smul.addr %s28, 8
      %s32 = scalar_lea.hbm %s1, %s31
      %s33 = sshll.u32 %s32, 4
      %s34 = int_to_ptr.hbm [resolvable:$true] %s33
      %s35 = sshll.u32 [#allocation5], 4
      %s36 = int_to_ptr.vmem [resolvable:$true] %s35
      %41 = dma.hbm_to_vmem [thread:$0]  %s34, 640, %s36, [#allocation6], 128, 128, 8
    $region9: #{tpu_custom_call.1} parent=1 // pred_fallthru
      _
    // Predicated region
    $region10: #{tpu_custom_call.1} parent=1 // pred_check
      _
    $region11: #{tpu_custom_call.1} parent=1 // pred_check_branch
      %43 = sbr.rel (0) target = $region13
    $region12: #{tpu_custom_call.1} parent=1 // pred_region
      %45 = dma.done [#allocation3], 640
    $region13: #{tpu_custom_call.1} parent=1 // pred_fallthru
      _
    // Predicated region
    $region14: #{tpu_custom_call.1} parent=1 // pred_check
      _
    $region15: #{tpu_custom_call.1} parent=1 // pred_check_branch
      %47 = sbr.rel (0) target = $region17
    $region16: #{tpu_custom_call.1} parent=1 // pred_region
      %49 = dma.done [#allocation6], 640
    $region17: #{tpu_custom_call.1} parent=1 // pred_fallthru
      _
    %s50 = sadd.s32 0, 0
    %s51 = sadd.s32 0, 0
    %p52 = scmp.eq.s32.totalorder 0, 0
    // Predicated region
    $region18: #{tpu_custom_call.1} parent=1 // pred_check
      %p53 = pneg %p52
    $region19: #{tpu_custom_call.1} parent=1 // pred_check_branch
      %55 = sbr.rel (%p53) target = $region21
    $region20: #{tpu_custom_call.1} parent=1 // pred_region
      %56 = vst [vmem:[#allocation7] sm:$0xff] 0.0
    $region21: #{tpu_custom_call.1} parent=1 // pred_fallthru
      _
    %v57 = vld [vmem:[#allocation2] sm:$0xff]
    %v58 = vld [vmem:[#allocation5] sm:$0xff]
    %v59 = vmax.f32 %v57, 0.0
    %v60 = vmul.f32 %v57, %v58
    %v61 = vsub.f32 %v59, %v60
    %v62 = vand.u32 2147483647, %v57
    %v63 = vsub.f32 0.0, %v62
    %v64 = vmul.f32 %v63, 1.442695
    %v65 = vpow.pop %v64
    %v66 = vadd.f32 %v65, 1.0
    %v67 = vlog2.pop %v66
    %v68 = vmul.f32 %v67, 0.6931472
    %v69 = vadd.f32 %v61, %v68
    %v70 = vmul.f32 %v69, 0.2
    %s71 = scalar_lea.vmem [#allocation2], 8
    %v72 = vld [vmem:[%s71] sm:$0xff]
    %v73 = vmul.f32 %v72, 0.5
    %v74 = vtanh.pop %v73
    %v75 = vmul.f32 %v74, 0.5
    %v76 = vadd.f32 %v75, 0.5
    %s77 = scalar_lea.vmem [#allocation2], 16
    %v78 = vld [vmem:[%s77] sm:$0xff]
    %v79 = vmul.f32 %v78, 0.5
    %v80 = vtanh.pop %v79
    %v81 = vmul.f32 %v80, 0.5
    %v82 = vadd.f32 %v81, 0.5
    %s83 = scalar_lea.vmem [#allocation2], 24
    %v84 = vld [vmem:[%s83] sm:$0xff]
    %v85 = vmul.f32 %v84, 0.5
    %v86 = vtanh.pop %v85
    %v87 = vmul.f32 %v86, 0.5
    %v88 = vadd.f32 %v87, 0.5
    %s89 = scalar_lea.vmem [#allocation2], 32
    %v90 = vld [vmem:[%s89] sm:$0xff]
    %v91 = vmul.f32 %v90, 0.5
    %v92 = vtanh.pop %v91
    %v93 = vmul.f32 %v92, 0.5
    %v94 = vadd.f32 %v93, 0.5
    %s95 = scalar_lea.vmem [#allocation5], 8
    %v96 = vld [vmem:[%s95] sm:$0xff]
    %s97 = scalar_lea.vmem [#allocation5], 16
    %v98 = vld [vmem:[%s97] sm:$0xff]
    %s99 = scalar_lea.vmem [#allocation5], 24
    %v100 = vld [vmem:[%s99] sm:$0xff]
    %s101 = scalar_lea.vmem [#allocation5], 32
    %v102 = vld [vmem:[%s101] sm:$0xff]
    %v103 = vmin.f32 %v88, %v76
    %v104 = vmax.f32 %v88, %v76
    %v105 = vmin.f32 %v82, %v94
    %v106 = vmax.f32 %v82, %v94
    %v107 = vsub.f32 %v104, %v103
    %v108 = vsub.f32 %v106, %v105
    %v109 = vsub.f32 %v100, %v96
    %v110 = vsub.f32 %v102, %v98
    %v111 = vmul.f32 %v107, %v108
    %v112 = vmul.f32 %v109, %v110
    %v113 = vmax.f32 %v103, %v96
    %v114 = vmin.f32 %v104, %v100
    %v115 = vmax.f32 %v105, %v98
    %v116 = vmin.f32 %v106, %v102
    %v117 = vsub.f32 %v114, %v113
    %v118 = vsub.f32 %v116, %v115
    %v119 = vmul.f32 %v117, %v118
    %v120 = vmax.f32 %v119, 0.0
    %v121 = vadd.f32 %v112, %v111
    %v122 = vsub.f32 %v121, %v120
    %v123 = vrcp.pop %v122
    %v124 = vmul.f32 %v122, %v123
    %v125 = vsub.f32 1.0, %v124
    %v126 = vmul.f32 %v123, %v125
    %v127 = vadd.f32 %v123, %v126
    %vm128 = vweird.f32 %v122
    %vm129 = vweird.f32 %v123
    %vm130 = vmor %vm128, %vm129
    %v131 = vsel %vm130, %v123, %v127
    %v132 = vand.u32 2147483647, %v122
    %vm133 = vcmp.eq.f32.partialorder %v132, 8.507059e+37
    %v134 = vand.u32 %v122, 2147483648
    %v135 = vor.u32 1.1754944e-38, %v134
    %v136 = vsel %vm133, %v135, %v131
    %v137 = vmul.f32 %v120, %v136
    %vm138 = vcmp.lt.f32.partialorder %v119, 0.0
    %v139 = vsel %vm138, 0.0, %v137
    %v140 = vmin.f32 %v103, %v96
    %v141 = vmax.f32 %v104, %v100
    %v142 = vmin.f32 %v105, %v98
    %v143 = vmax.f32 %v106, %v102
    %v144 = vsub.f32 %v141, %v140
    %v145 = vsub.f32 %v143, %v142
    %v146 = vadd.f32 %v104, %v103
    %v147 = vadd.f32 %v100, %v96
    %v148 = vsub.f32 %v146, %v147
    %v149 = vadd.f32 %v106, %v105
    %v150 = vadd.f32 %v102, %v98
    %v151 = vsub.f32 %v149, %v150
    %v152 = vsub.f32 %v107, %v109
    %v153 = vsub.f32 %v108, %v110
    %v154 = vmul.f32 %v144, %v144
    %v155 = vmul.f32 %v110, %v110
    %v156 = vmul.f32 %v145, %v145
    %v157 = vadd.f32 %v154, %v156
    %v158 = vmul.f32 %v148, %v148
    %v159 = vmul.f32 %v151, %v151
    %v160 = vadd.f32 %v158, %v159
    %v161 = vmul.f32 %v160, 0.25
    %v162 = vmul.f32 %v154, %v155
    %v163 = vmul.f32 %v161, %v162
    %v164 = vmul.f32 %v152, %v152
    %v165 = vmul.f32 %v157, %v155
    %v166 = vmul.f32 %v164, %v165
    %v167 = vadd.f32 %v163, %v166
    %v168 = vmul.f32 %v153, %v153
    %v169 = vmul.f32 %v157, %v154
    %v170 = vmul.f32 %v168, %v169
    %v171 = vadd.f32 %v167, %v170
    %v172 = vmul.f32 %v169, %v155
    %v173 = vrcp.pop %v172
    %v174 = vmul.f32 %v172, %v173
    %v175 = vsub.f32 1.0, %v174
    %v176 = vmul.f32 %v173, %v175
    %v177 = vadd.f32 %v173, %v176
    %vm178 = vweird.f32 %v172
    %vm179 = vweird.f32 %v173
    %vm180 = vmor %vm178, %vm179
    %v181 = vsel %vm180, %v173, %v177
    %v182 = vand.u32 2147483647, %v172
    %vm183 = vcmp.eq.f32.partialorder %v182, 8.507059e+37
    %v184 = vand.u32 %v172, 2147483648
    %v185 = vor.u32 1.1754944e-38, %v184
    %v186 = vsel %vm183, %v185, %v181
    %v187 = vmul.f32 %v171, %v186
    %v188 = vsub.f32 %v137, %v187
    %v189 = vsub.f32 1.0, %v188
    %v190 = vrsqrt.pop %v139
    %v191 = vmul.f32 %v190, %v139
    %v192 = vmul.f32 %v191, %v190
    %v193 = vmul.f32 0.5, %v192
    %v194 = vsub.f32 1.5, %v193
    %v195 = vmul.f32 %v190, %v194
    %v196 = vmul.f32 %v139, %v195
    %vm197 = vcmp.eq.f32.partialorder %v139, inf
    %v198 = vsel %vm197, %v139, %v196
    %vm199 = vcmp.eq.f32.partialorder %v139, 0.0
    %v200 = vand.u32 %v139, 2147483648
    %v201 = vsel %vm199, %v200, %v198
    %v202 = vmul.f32 %v201, %v189
    %v203 = vadd.f32 %v70, %v202
    %s204 = sadd.s32 0, 0
    %s205 = smul.u32 %s204, 8
    %s206 = sadd.s32 %s205, 8
    %s207 = smul.u32 %s206, 128
    %p208 = scmp.gt.s32.totalorder %s207, 8
    %p209 = scmp.le.s32.totalorder %s207, 8
    // Predicated region
    $region22: #{tpu_custom_call.1} parent=1 // pred_check
      %p210 = pneg %p209
    $region23: #{tpu_custom_call.1} parent=1 // pred_check_branch
      %212 = sbr.rel (%p210) target = $region25
    $region24: #{tpu_custom_call.1} parent=1 // pred_region
      %v213 = vld [vmem:[#allocation7] sm:$0xff]
      %v214 = vadd.f32 %v203, 0.0
      %v215 = vadd.f32 %v213, %v214
      %216 = vst [vmem:[#allocation7] sm:$0xff] %v215
    $region25: #{tpu_custom_call.1} parent=1 // pred_fallthru
      _
    // Predicated region
    $region26: #{tpu_custom_call.1} parent=1 // pred_check
      %p217 = pneg %p208
    $region27: #{tpu_custom_call.1} parent=1 // pred_check_branch
      %219 = sbr.rel (%p217) target = $region29
    $region28: #{tpu_custom_call.1} parent=1 // pred_region
      %v220 = vlaneseq
      %v221 = vshrl.u32 %v220, 7
      %v222 = vlaneseq
      %v223 = vand.u32 %v222, 127
      %v224 = vstv %s205
      %v225 = vadd.s32 %v224, %v221
      %v226 = vmul.u32 %v225, 128
      %v227 = vadd.s32 %v226, %v223
      %vm228 = vcmp.lt.s32.totalorder %v227, 8
      %v229 = vsel %vm228, %v203, 0.0
      %v230 = vld [vmem:[#allocation7] sm:$0xff]
      %v231 = vadd.f32 %v229, 0.0
      %v232 = vadd.f32 %v230, %v231
      %233 = vst [vmem:[#allocation7] sm:$0xff] %v232
    $region29: #{tpu_custom_call.1} parent=1 // pred_fallthru
      _
    // Predicated region
    $region30: #{tpu_custom_call.1} parent=1 // pred_check
      _
    $region31: #{tpu_custom_call.1} parent=1 // pred_check_branch
      %235 = sbr.rel (0) target = $region33
    $region32: #{tpu_custom_call.1} parent=1 // pred_region
      %237 = vsyncadd [#allocation4], 0
      %s239 = sshll.u32 [#allocation7], 4
      %s240 = int_to_ptr.vmem [resolvable:$true] %s239
      %s241 = sshll.u32 %s2, 4
      %s242 = int_to_ptr.hbm [resolvable:$true] %s241
      %244 = dma.vmem_to_hbm [thread:$0]  %s240, 128, %s242, [#allocation4]
    $region33: #{tpu_custom_call.1} parent=1 // pred_fallthru
      _
    // Predicated region
    $region34: #{tpu_custom_call.1} parent=1 // pred_check
      _
    $region35: #{tpu_custom_call.1} parent=1 // pred_check_branch
      %246 = sbr.rel (0) target = $region37
    $region36: #{tpu_custom_call.1} parent=1 // pred_region
      %248 = dma.done [#allocation4], 128
    $region37: #{tpu_custom_call.1} parent=1 // pred_fallthru
      _
    %249 = vsyncpa [#allocation3], 1
    %250 = vsyncpa [#allocation6], 1
    %251 = vsyncpa [#allocation4], 1

</llo_original>
